<compile_context>
chip_gen: v5e
topology: v5e:2x2
jax: 0.10.0
libtpu: 0.0.40
codegen_flags: <defaults>
</compile_context>

<pallas_src>
import numpy as np
import jax
import jax.numpy as jnp
from jax.experimental import pallas as pl
from jax.experimental.pallas import tpu as pltpu


# ---------------------------------------------------------------------------
# Kernel: one batch element per grid step.
#   t   = x_slab @ C        (1x1 conv fused with width bilinear interp, MXU)
#   u   = A_h @ t           (height bilinear interp, MXU)
#   out = u + y_slab        (skip add, lane-dense store)
# ---------------------------------------------------------------------------
def skip_upsample_kernel(x_ref, c_ref, ah_ref, y_ref, o_ref):
    # x_ref : (1, H,  Cin*W)     one batch slab, (channel, width) folded on lanes
    # c_ref : (Cin*W, Cout*W2)   fused 1x1-conv + width-interp matrix
    # ah_ref: (H2, H)            height interpolation matrix
    # y_ref : (1, H2, Cout*W2)   skip connection (lane-dense, aliased with o_ref)
    # o_ref : (1, H2, Cout*W2)
    t = jnp.dot(x_ref[0], c_ref[...],
                precision=jax.lax.Precision.HIGHEST,
                preferred_element_type=jnp.float32)          # (H, Cout*W2)
    u = jnp.dot(ah_ref[...], t,
                precision=jax.lax.Precision.HIGHEST,
                preferred_element_type=jnp.float32)          # (H2, Cout*W2)
    o_ref[0] = (u + y_ref[0]).astype(o_ref.dtype)


def skip_upsample_pallas(x_f, c_mat, a_h, y_f):
    # x_f: (N, H, Cin*W), c_mat: (Cin*W, Cout*W2), a_h: (H2, H), y_f: (N, H2, Cout*W2)
    N, H, CinW = x_f.shape
    _, H2, CoutW2 = y_f.shape
    return pl.pallas_call(
        skip_upsample_kernel,
        out_shape=jax.ShapeDtypeStruct((N, H2, CoutW2), jnp.float32),
        grid=(N,),
        in_specs=[
            pl.BlockSpec((1, H, CinW), lambda b: (b, 0, 0)),        # x slab
            pl.BlockSpec((CinW, CoutW2), lambda b: (0, 0)),          # fused conv+interp
            pl.BlockSpec((H2, H), lambda b: (0, 0)),                 # height interp
            pl.BlockSpec((1, H2, CoutW2), lambda b: (b, 0, 0)),      # skip y
        ],
        out_specs=pl.BlockSpec((1, H2, CoutW2), lambda b: (b, 0, 0)),
        # y_f is a wrapper-internal intermediate -> safe to donate into the output.
        input_output_aliases={3: 0},
        compiler_params=pltpu.CompilerParams(
            dimension_semantics=("parallel",)),   # batch across TCs on v7x
    )(x_f, c_mat, a_h, y_f)


# ---------------------------------------------------------------------------
# Host-side constants + layout plumbing (no compute hoisting: only reshapes /
# transposes and the tiny (96,128) weight-kron, built once per conv weight).
# ---------------------------------------------------------------------------
def bilinear_matrix(in_size, out_size):
    """1-D bilinear interpolation matrix matching PyTorch align_corners=False."""
    A = np.zeros((out_size, in_size), dtype=np.float32)
    scale = in_size / out_size
    for o in range(out_size):
        src = max((o + 0.5) * scale - 0.5, 0.0)
        i0 = min(int(np.floor(src)), in_size - 1)
        i1 = min(i0 + 1, in_size - 1)
        lam = src - i0
        A[o, i0] += 1.0 - lam
        A[o, i1] += lam
    return A


@jax.jit
def skip_upsample_forward(x_nchw, y_nchw, conv_w):
    """x: (N, Cin, H, W), y: (N, Cout, 2H, 2W), conv_w: (Cout, Cin, 1, 1) -> (N, Cout, 2H, 2W)."""
    N, Cin, H, W = x_nchw.shape
    _, Cout, H2, W2 = y_nchw.shape

    a_h = jnp.asarray(bilinear_matrix(H, H2))                         # (H2, H)
    a_wt = jnp.asarray(np.ascontiguousarray(bilinear_matrix(W, W2).T))  # (W, W2)
    w_mat = conv_w.reshape(Cout, Cin)                                 # (Cout, Cin)

    # Fused (1x1 conv o width-interp) matrix:
    #   C[c*W + w, o*W2 + w2] = w_mat[o, c] * A_w^T[w, w2]
    c_mat = jnp.einsum("oc,wv->cwov", w_mat, a_wt).reshape(Cin * W, Cout * W2)

    # Layout plumbing: fold channels into the lane axis (lane-dense kernel views).
    x_f = jnp.transpose(x_nchw, (0, 2, 1, 3)).reshape(N, H, Cin * W)       # (N, H, Cin*W)
    y_f = jnp.transpose(y_nchw, (0, 2, 1, 3)).reshape(N, H2, Cout * W2)    # (N, H2, Cout*W2)

    out_f = skip_upsample_pallas(x_f, c_mat, a_h, y_f)                     # (N, H2, Cout*W2)
    return jnp.transpose(out_f.reshape(N, H2, Cout, W2), (0, 2, 1, 3))     # (N, Cout, H2, W2)


# ---------------------------------------------------------------------------
# Pure-numpy reference (gather-style bilinear, matches F.interpolate semantics:
# upsample -> 1x1 conv -> add skip, exactly as in the PyTorch module).
# ---------------------------------------------------------------------------
def reference_forward(x, y, conv_w):
    x = np.asarray(x, np.float32)
    y = np.asarray(y, np.float32)
    w = np.asarray(conv_w, np.float32)
    N, C, H, W = x.shape
    H2, W2 = 2 * H, 2 * W
    up = np.zeros((N, C, H2, W2), np.float32)
    for oh in range(H2):
        sh = max((oh + 0.5) * 0.5 - 0.5, 0.0)
        h0 = min(int(np.floor(sh)), H - 1)
        h1 = min(h0 + 1, H - 1)
        lh = sh - h0
        for ow in range(W2):
            sw = max((ow + 0.5) * 0.5 - 0.5, 0.0)
            w0 = min(int(np.floor(sw)), W - 1)
            w1 = min(w0 + 1, W - 1)
            lw = sw - w0
            up[:, :, oh, ow] = (
                (1 - lh) * (1 - lw) * x[:, :, h0, w0]
                + (1 - lh) * lw * x[:, :, h0, w1]
                + lh * (1 - lw) * x[:, :, h1, w0]
                + lh * lw * x[:, :, h1, w1]
            )
    conv = np.einsum("oc,nchw->nohw", w.reshape(w.shape[0], w.shape[1]), up)
    return conv + y


if __name__ == "__main__":
    # Module config: SkipUpSample(in_channels=4, s_factor=2)
    in_channels, s_factor = 4, 2
    Cin, Cout = in_channels + s_factor, in_channels
    N, H, W = 2, 16, 16
    H2, W2 = 2 * H, 2 * W

    key = jax.random.PRNGKey(0)
    kx, ky, kw = jax.random.split(key, 3)
    x = jax.random.normal(kx, (N, Cin, H, W), dtype=jnp.float32)       # input to upsample branch
    y = jax.random.normal(ky, (N, Cout, H2, W2), dtype=jnp.float32)    # skip connection
    conv_w = (jax.random.normal(kw, (Cout, Cin, 1, 1), dtype=jnp.float32)
              * (1.0 / np.sqrt(Cin)))                                   # deterministic 1x1 weight

    # Host copies for the reference (caller's x/y are NOT donated — only the
    # wrapper-internal transposed copy of y is aliased into the output).
    x_np, y_np, w_np = np.asarray(x), np.asarray(y), np.asarray(conv_w)

    out = jax.block_until_ready(skip_upsample_forward(x, y, conv_w))

    ref = reference_forward(x_np, y_np, w_np)
    np.testing.assert_allclose(np.asarray(out), ref, rtol=1e-4, atol=1e-4)

    print("KERNEL_OK")
</pallas_src>

<mosaic_0001>
module attributes {stable_mosaic.version = 11 : i64} {
  func.func @skip_upsample_kernel(%arg0: i32, %arg1: memref<1x16x96xf32, #tpu.memory_space<vmem>>, %arg2: memref<96x128xf32, #tpu.memory_space<vmem>>, %arg3: memref<32x16xf32, #tpu.memory_space<vmem>>, %arg4: memref<1x32x128xf32, #tpu.memory_space<vmem>>, %arg5: memref<1x32x128xf32, #tpu.memory_space<vmem>>) attributes {dimension_semantics = [#tpu.dimension_semantics<parallel>], iteration_bounds = array<i64: 2>, scalar_prefetch = 0 : i64, scratch_operands = 0 : i64, tpu.core_type = #tpu.core_type<tc>, window_params = [{transform_indices = @transform_0, window_bounds = array<i64: 1, 16, 96>}, {pipeline_mode = #tpu.pipeline_mode<synchronous>, transform_indices = @transform_1, window_bounds = array<i64: 96, 128>}, {pipeline_mode = #tpu.pipeline_mode<synchronous>, transform_indices = @transform_2, window_bounds = array<i64: 32, 16>}, {transform_indices = @transform_3, window_bounds = array<i64: 1, 32, 128>}, {transform_indices = @transform_4, window_bounds = array<i64: 1, 32, 128>}]} {
    %c0 = arith.constant 0 : index
    %c0_0 = arith.constant 0 : index
    %c0_1 = arith.constant 0 : index
    %0 = vector.load %arg1[%c0, %c0_0, %c0_1] : memref<1x16x96xf32, #tpu.memory_space<vmem>>, vector<1x16x96xf32>
    %1 = vector.shape_cast %0 : vector<1x16x96xf32> to vector<16x96xf32>
    %c0_2 = arith.constant 0 : index
    %c0_3 = arith.constant 0 : index
    %2 = vector.load %arg2[%c0_2, %c0_3] : memref<96x128xf32, #tpu.memory_space<vmem>>, vector<96x128xf32>
    %cst = arith.constant dense<0.000000e+00> : vector<16x128xf32>
    %3 = tpu.matmul %1, %2, %cst {dimension_numbers = #tpu.dot_dimension_numbers<[1], [0], [0], [1], [0, 0, 1, 1], [], []>, precision = #tpu.contract_precision<fp32>} : vector<16x96xf32>, vector<96x128xf32>, vector<16x128xf32> -> vector<16x128xf32>
    %c0_4 = arith.constant 0 : index
    %c0_5 = arith.constant 0 : index
    %4 = vector.load %arg3[%c0_4, %c0_5] : memref<32x16xf32, #tpu.memory_space<vmem>>, vector<32x16xf32>
    %cst_6 = arith.constant dense<0.000000e+00> : vector<32x128xf32>
    %5 = tpu.matmul %4, %3, %cst_6 {dimension_numbers = #tpu.dot_dimension_numbers<[1], [0], [0], [1], [0, 0, 1, 1], [], []>, precision = #tpu.contract_precision<fp32>} : vector<32x16xf32>, vector<16x128xf32>, vector<32x128xf32> -> vector<32x128xf32>
    %c0_7 = arith.constant 0 : index
    %c0_8 = arith.constant 0 : index
    %c0_9 = arith.constant 0 : index
    %6 = vector.load %arg4[%c0_7, %c0_8, %c0_9] : memref<1x32x128xf32, #tpu.memory_space<vmem>>, vector<1x32x128xf32>
    %7 = vector.shape_cast %6 : vector<1x32x128xf32> to vector<32x128xf32>
    %8 = arith.addf %5, %7 : vector<32x128xf32>
    %c0_10 = arith.constant 0 : index
    %c0_11 = arith.constant 0 : index
    %c0_12 = arith.constant 0 : index
    %9 = vector.load %arg5[%c0_10, %c0_11, %c0_12] : memref<1x32x128xf32, #tpu.memory_space<vmem>>, vector<1x32x128xf32>
    %10 = vector.shape_cast %9 : vector<1x32x128xf32> to vector<32x128xf32>
    %11 = vector.shape_cast %8 : vector<32x128xf32> to vector<1x32x128xf32>
    tpu.vector_store %arg5[%c0_10, %c0_11, %c0_12], %11 {strides = array<i32>} : memref<1x32x128xf32, #tpu.memory_space<vmem>>, vector<1x32x128xf32>,
    return
  }
  func.func @transform_0(%arg0: i32) -> (i32, i32, i32) {
    %c0_i32 = arith.constant 0 : i32
    %c0_i32_0 = arith.constant 0 : i32
    %c0_i32_1 = arith.constant 0 : i32
    return %arg0, %c0_i32, %c0_i32_0 : i32, i32, i32
  }
  func.func @transform_1(%arg0: i32) -> (i32, i32) {
    %c0_i32 = arith.constant 0 : i32
    %c0_i32_0 = arith.constant 0 : i32
    %c0_i32_1 = arith.constant 0 : i32
    return %c0_i32, %c0_i32_0 : i32, i32
  }
  func.func @transform_2(%arg0: i32) -> (i32, i32) {
    %c0_i32 = arith.constant 0 : i32
    %c0_i32_0 = arith.constant 0 : i32
    %c0_i32_1 = arith.constant 0 : i32
    return %c0_i32, %c0_i32_0 : i32, i32
  }
  func.func @transform_3(%arg0: i32) -> (i32, i32, i32) {
    %c0_i32 = arith.constant 0 : i32
    %c0_i32_0 = arith.constant 0 : i32
    %c0_i32_1 = arith.constant 0 : i32
    return %arg0, %c0_i32, %c0_i32_0 : i32, i32, i32
  }
  func.func @transform_4(%arg0: i32) -> (i32, i32, i32) {
    %c0_i32 = arith.constant 0 : i32
    %c0_i32_0 = arith.constant 0 : i32
    %c0_i32_1 = arith.constant 0 : i32
    return %arg0, %c0_i32, %c0_i32_0 : i32, i32, i32
  }
}

</mosaic_0001>

<llo_original>
// kernel: skip_upsample_forward.1
$region0: #{skip_upsample_forward.1}
  #allocation0 [shape = 'u32[]', space=smem, size = 0x4, offset = 0x4, fixed_abs, tag = 'smem constant byte address 0x4 - core index']
  #allocation1 [shape = 'u32[72,128]{1,0:T(1,128)}', space=vmem, size = 0x9000, scoped, tag = 'internal scratch']
  %s0 = inlined_call_operand.vmem [shape: f32[2,16,96], index: 0, kind: input, shape index: {}]
  %s1 = inlined_call_operand.vmem [shape: f32[96,128], index: 1, kind: input, shape index: {}]
  %s2 = inlined_call_operand.vmem [shape: f32[32,16], index: 2, kind: input, shape index: {}]
  %s3 = inlined_call_operand.vmem [shape: f32[2,32,128], index: 3, kind: input, shape index: {}, may-alias: {3,4}]
  %s4 = inlined_call_operand.vmem [shape: f32[2,32,128], index: 4, kind: output, shape index: {}, may-alias: {3,4}]
  %s5 = sld [smem:[#allocation0]]
  $region49: #{skip_upsample_forward.1} parent=0
    _
  %s7 = ssub.s32 1, %s5
  %s8 = scalar_select 0, %s7, %s5
  loop: start=0, step=1, limit=4
  $region2: #{skip_upsample_forward.1} parent=0 // loop_pre_header
    _
  $region3: #{skip_upsample_forward.1} parent=0 // loop_header
    %s10 = sphi 0, %s14
    %p11 = scmp.ge.s32.totalorder %s10, 4
    %s20 = sphi 0, %s22
    %s23 = sphi 0, %s20
    %s24 = sphi 0, %s23
    %s40 = sphi 0, %s24
    %s44 = sphi 0, %s44
    %s46 = sphi 0, %s44
    %s47 = sphi 0, %s46
    %s61 = sphi 0, %s47
    %s65 = sphi 0, %s65
    %s67 = sphi 0, %s65
    %s68 = sphi 0, %s67
    %s82 = sphi 0, %s68
    %s88 = sphi 0, %s90
    %s91 = sphi 0, %s88
    %s92 = sphi 0, %s91
    %s108 = sphi 0, %s92
    %s114 = sphi 0, %s116
    %s117 = sphi 0, %s114
    %s118 = sphi 0, %s117
    %s134 = sphi 0, %s118
  $region4: #{skip_upsample_forward.1} parent=0 // loop_header_branch
    %13 = sbr.rel (%p11) target = $region8
  $region5: #{skip_upsample_forward.1} parent=0 // loop_body
    %s15 = ssub.s32 %s10, 1
    %s16 = ssub.s32 %s10, 2
    %s17 = sadd.s32 %s10, 1
    %s18 = ssub.s32 %s10, %s17
    %p19 = scmp.eq.s32.totalorder %s18, 0
    %s21 = sadd.s32 %s20, 1
    %s22 = scalar_select %p19, %s20, %s21
    %p25 = pneg %p19
    %p26 = scmp.eq.s32.totalorder %s10, 1
    %p27 = por %p25, %p26
    %p28 = scmp.ne.s32.totalorder %s20, %s23
    %p29 = scmp.eq.s32.totalorder %s10, 0
    %p30 = por %p28, %p29
    %p31 = scmp.ne.s32.totalorder %s20, %s23
    %p32 = scmp.eq.s32.totalorder %s15, 1
    %p33 = por %p31, %p32
    %p34 = scmp.ne.s32.totalorder %s23, %s24
    %p35 = scmp.eq.s32.totalorder %s15, 0
    %p36 = por %p34, %p35
    %p37 = scmp.ne.s32.totalorder %s23, %s24
    %p38 = scmp.eq.s32.totalorder %s16, 1
    %p39 = por %p37, %p38
    %p41 = scmp.ne.s32.totalorder %s24, %s40
    %p42 = scmp.eq.s32.totalorder %s16, 0
    %p43 = por %p41, %p42
    %s45 = sadd.s32 %s44, 1
    %p48 = scmp.eq.s32.totalorder %s10, 1
    %p49 = scmp.ne.s32.totalorder %s44, %s46
    %p50 = scmp.eq.s32.totalorder %s10, 0
    %p51 = por %p49, %p50
    %p52 = scmp.ne.s32.totalorder %s44, %s46
    %p53 = scmp.eq.s32.totalorder %s15, 1
    %p54 = por %p52, %p53
    %p55 = scmp.ne.s32.totalorder %s46, %s47
    %p56 = scmp.eq.s32.totalorder %s15, 0
    %p57 = por %p55, %p56
    %p58 = scmp.ne.s32.totalorder %s46, %s47
    %p59 = scmp.eq.s32.totalorder %s16, 1
    %p60 = por %p58, %p59
    %p62 = scmp.ne.s32.totalorder %s47, %s61
    %p63 = scmp.eq.s32.totalorder %s16, 0
    %p64 = por %p62, %p63
    %s66 = sadd.s32 %s65, 1
    %p69 = scmp.eq.s32.totalorder %s10, 1
    %p70 = scmp.ne.s32.totalorder %s65, %s67
    %p71 = scmp.eq.s32.totalorder %s10, 0
    %p72 = por %p70, %p71
    %p73 = scmp.ne.s32.totalorder %s65, %s67
    %p74 = scmp.eq.s32.totalorder %s15, 1
    %p75 = por %p73, %p74
    %p76 = scmp.ne.s32.totalorder %s67, %s68
    %p77 = scmp.eq.s32.totalorder %s15, 0
    %p78 = por %p76, %p77
    %p79 = scmp.ne.s32.totalorder %s67, %s68
    %p80 = scmp.eq.s32.totalorder %s16, 1
    %p81 = por %p79, %p80
    %p83 = scmp.ne.s32.totalorder %s68, %s82
    %p84 = scmp.eq.s32.totalorder %s16, 0
    %p85 = por %p83, %p84
    %s86 = ssub.s32 %s10, %s17
    %p87 = scmp.eq.s32.totalorder %s86, 0
    %s89 = sadd.s32 %s88, 1
    %s90 = scalar_select %p87, %s88, %s89
    %p93 = pneg %p87
    %p94 = scmp.eq.s32.totalorder %s10, 1
    %p95 = por %p93, %p94
    %p96 = scmp.ne.s32.totalorder %s88, %s91
    %p97 = scmp.eq.s32.totalorder %s10, 0
    %p98 = por %p96, %p97
    %p99 = scmp.ne.s32.totalorder %s88, %s91
    %p100 = scmp.eq.s32.totalorder %s15, 1
    %p101 = por %p99, %p100
    %p102 = scmp.ne.s32.totalorder %s91, %s92
    %p103 = scmp.eq.s32.totalorder %s15, 0
    %p104 = por %p102, %p103
    %p105 = scmp.ne.s32.totalorder %s91, %s92
    %p106 = scmp.eq.s32.totalorder %s16, 1
    %p107 = por %p105, %p106
    %p109 = scmp.ne.s32.totalorder %s92, %s108
    %p110 = scmp.eq.s32.totalorder %s16, 0
    %p111 = por %p109, %p110
    %s112 = ssub.s32 %s10, %s17
    %p113 = scmp.eq.s32.totalorder %s112, 0
    %s115 = sadd.s32 %s114, 1
    %s116 = scalar_select %p113, %s114, %s115
    %p119 = pneg %p113
    %p120 = scmp.eq.s32.totalorder %s10, 1
    %p121 = por %p119, %p120
    %p122 = scmp.ne.s32.totalorder %s114, %s117
    %p123 = scmp.eq.s32.totalorder %s10, 0
    %p124 = por %p122, %p123
    %p125 = scmp.ne.s32.totalorder %s114, %s117
    %p126 = scmp.eq.s32.totalorder %s15, 1
    %p127 = por %p125, %p126
    %p128 = scmp.ne.s32.totalorder %s117, %s118
    %p129 = scmp.eq.s32.totalorder %s15, 0
    %p130 = por %p128, %p129
    %p131 = scmp.ne.s32.totalorder %s117, %s118
    %p132 = scmp.eq.s32.totalorder %s16, 1
    %p133 = por %p131, %p132
    %p135 = scmp.ne.s32.totalorder %s118, %s134
    %p136 = scmp.eq.s32.totalorder %s16, 0
    %p137 = por %p135, %p136
    %p138 = scmp.le.s32.totalorder 1, %s10
    %p139 = scmp.lt.s32.totalorder %s10, 3
    %p140 = pnand %p138, %p139
    %p141 = pneg %p140
    // Predicated region
    $region9: #{skip_upsample_forward.1} parent=5 // pred_check
      _
    $region10: #{skip_upsample_forward.1} parent=5 // pred_check_branch
      %143 = sbr.rel (%p140) target = $region12
    $region11: #{skip_upsample_forward.1} parent=5 // pred_region
      %s144 = ssub.s32 %s10, 1
      // Predicated region
      $region13: #{skip_upsample_forward.1} parent=11 // pred_check
        %p145 = pneg %p57
      $region14: #{skip_upsample_forward.1} parent=11 // pred_check_branch
        %147 = sbr.rel (%p145) target = $region16
      $region15: #{skip_upsample_forward.1} parent=11 // pred_region
        _
      $region16: #{skip_upsample_forward.1} parent=11 // pred_fallthru
        _
      // Predicated region
      $region17: #{skip_upsample_forward.1} parent=11 // pred_check
        %p148 = pneg %p78
      $region18: #{skip_upsample_forward.1} parent=11 // pred_check_branch
        %150 = sbr.rel (%p148) target = $region20
      $region19: #{skip_upsample_forward.1} parent=11 // pred_region
        _
      $region20: #{skip_upsample_forward.1} parent=11 // pred_fallthru
        _
    $region12: #{skip_upsample_forward.1} parent=5 // pred_fallthru
      _
    %p151 = scmp.lt.s32.totalorder %s10, 2
    // Predicated region
    $region21: #{skip_upsample_forward.1} parent=5 // pred_check
      %p152 = pneg %p151
    $region22: #{skip_upsample_forward.1} parent=5 // pred_check_branch
      %154 = sbr.rel (%p152) target = $region24
    $region23: #{skip_upsample_forward.1} parent=5 // pred_region
      // Predicated region
      $region25: #{skip_upsample_forward.1} parent=23 // pred_check
        %p155 = pneg %p30
      $region26: #{skip_upsample_forward.1} parent=23 // pred_check_branch
        %157 = sbr.rel (%p155) target = $region28
      $region27: #{skip_upsample_forward.1} parent=23 // pred_region
        %p158 = scmp.lt.s32.totalorder %s10, 1
        %s159 = scalar_select %p158, %s10, 1
        %s160 = smul.addr %s159, 2
        %s161 = smul.addr %s160, 8
        %s162 = scalar_lea.vmem %s0, %s161
      $region28: #{skip_upsample_forward.1} parent=23 // pred_fallthru
        _
      // Predicated region
      $region29: #{skip_upsample_forward.1} parent=23 // pred_check
        %p163 = pneg %p98
      $region30: #{skip_upsample_forward.1} parent=23 // pred_check_branch
        %165 = sbr.rel (%p163) target = $region32
      $region31: #{skip_upsample_forward.1} parent=23 // pred_region
        %p166 = scmp.lt.s32.totalorder %s10, 1
        %s167 = scalar_select %p166, %s10, 1
        %s168 = smul.addr %s167, 4
        %s169 = smul.addr %s168, 8
        %s170 = scalar_lea.vmem %s3, %s169
      $region32: #{skip_upsample_forward.1} parent=23 // pred_fallthru
        _
    $region24: #{skip_upsample_forward.1} parent=5 // pred_fallthru
      _
    %p171 = scmp.le.s32.totalorder 1, %s10
    %p172 = scmp.lt.s32.totalorder %s10, 3
    %p173 = pnand %p171, %p172
    %p174 = pneg %p173
    // Predicated region
    $region33: #{skip_upsample_forward.1} parent=5 // pred_check
      _
    $region34: #{skip_upsample_forward.1} parent=5 // pred_check_branch
      %176 = sbr.rel (%p173) target = $region36
    $region35: #{skip_upsample_forward.1} parent=5 // pred_region
      %s177 = ssub.s32 %s10, 1
      %p178 = scmp.lt.s32.totalorder %s15, 1
      %s179 = scalar_select %p178, %s15, 1
      %s180 = smul.addr %s179, 2
      %s181 = smul.addr %s180, 8
      %s182 = scalar_lea.vmem %s0, %s181
      %p183 = pneg %p36
      %p184 = pneg %p33
      %p185 = pneg %p57
      %p186 = pneg %p54
      %p187 = pneg %p78
      %p188 = pneg %p75
      %p189 = scmp.lt.s32.totalorder %s15, 1
      %s190 = scalar_select %p189, %s15, 1
      %s191 = smul.addr %s190, 4
      %s192 = smul.addr %s191, 8
      %s193 = scalar_lea.vmem %s3, %s192
      %p194 = pneg %p104
      %p195 = pneg %p101
      %p196 = pneg %p130
      %p197 = pneg %p127
      %p198 = scmp.lt.s32.totalorder %s15, 1
      %s199 = scalar_select %p198, %s15, 1
      %s200 = smul.addr %s199, 4
      %s201 = smul.addr %s200, 8
      %s202 = scalar_lea.vmem %s4, %s201
      %p203 = scmp.lt.s32.totalorder %s15, 1
      %s204 = scalar_select %p203, %s15, 1
      %s205 = smul.addr %s204, 2
      %s206 = smul.addr %s205, 8
      %s207 = scalar_lea.vmem %s0, %s206
      %p208 = scmp.lt.s32.totalorder %s15, 1
      %s209 = scalar_select %p208, %s15, 1
      %s210 = smul.addr %s209, 4
      %s211 = smul.addr %s210, 8
      %s212 = scalar_lea.vmem %s3, %s211
      %p213 = scmp.lt.s32.totalorder %s15, 1
      %s214 = scalar_select %p213, %s15, 1
      %s215 = smul.addr %s214, 4
      %s216 = smul.addr %s215, 8
      %s217 = scalar_lea.vmem %s4, %s216
      %v218 = vld [vmem:[%s207] sm:$0xff]
      %v219 = vld [vmem:[%s207 + $0x8] sm:$0xff]
      %v220 = vld [vmem:[%s1] sm:$0xff]
      %v221 = vld [vmem:[%s1 + $0x8] sm:$0xff]
      %v222 = vld [vmem:[%s1 + $0x10] sm:$0xff]
      %v223 = vld [vmem:[%s1 + $0x18] sm:$0xff]
      %v224 = vld [vmem:[%s1 + $0x20] sm:$0xff]
      %v225 = vld [vmem:[%s1 + $0x28] sm:$0xff]
      %v226 = vld [vmem:[%s1 + $0x30] sm:$0xff]
      %v227 = vld [vmem:[%s1 + $0x38] sm:$0xff]
      %v228 = vld [vmem:[%s1 + $0x40] sm:$0xff]
      %v229 = vld [vmem:[%s1 + $0x48] sm:$0xff]
      %v230 = vld [vmem:[%s1 + $0x50] sm:$0xff]
      %v231 = vld [vmem:[%s1 + $0x58] sm:$0xff]
      %vm232 = vcmask 785408
      %v234 = vsel %vm232, %v218, 0
      %v237 = vsel %vm232, %v219, 0
      %239 = vmatpush.msra.mxu0 0.0
      %240 = vmatpush.msra.mxu0 0.0
      %241 = vmatpush.msra.mxu0 0.0
      %242 = vmatpush.msra.mxu0 0.0
      %v243 = vand.u32 %v231, 4294901760
      %244 = vmatpush.msra.mxu0 %v243
      %v245 = vand.u32 %v230, 4294901760
      %246 = vmatpush.msra.mxu0 %v245
      %v247 = vand.u32 %v229, 4294901760
      %248 = vmatpush.msra.mxu0 %v247
      %v249 = vand.u32 %v228, 4294901760
      %250 = vmatpush.msra.mxu0 %v249
      %v251 = vand.u32 %v227, 4294901760
      %252 = vmatpush.msra.mxu0 %v251
      %v253 = vand.u32 %v226, 4294901760
      %254 = vmatpush.msra.mxu0 %v253
      %v255 = vand.u32 %v225, 4294901760
      %256 = vmatpush.msra.mxu0 %v255
      %v257 = vand.u32 %v224, 4294901760
      %258 = vmatpush.msra.mxu0 %v257
      %v259 = vand.u32 %v223, 4294901760
      %260 = vmatpush.msra.mxu0 %v259
      %v261 = vand.u32 %v222, 4294901760
      %262 = vmatpush.msra.mxu0 %v261
      %v263 = vand.u32 %v221, 4294901760
      %264 = vmatpush.msra.mxu0 %v263
      %v265 = vand.u32 %v220, 4294901760
      %266 = vmatpush.msra.mxu0 %v265
      %v267 = vand.u32 %v234, 4294901760
      %v268 = vsub.f32 %v234, %v267
      %v269 = vand.u32 %v268, 4294901760
      %v270 = vsub.f32 %v268, %v269
      %v271 = vand.u32 %v270, 4294901760
      %272 = vmatmul.f32.gmra.mxu0 %v271
      %v273 = vpop.f32.mrf.mxu0
      %v274 = vadd.f32 0.0, %v273
      %v275 = vand.u32 %v237, 4294901760
      %v276 = vsub.f32 %v237, %v275
      %v277 = vand.u32 %v276, 4294901760
      %v278 = vsub.f32 %v276, %v277
      %v279 = vand.u32 %v278, 4294901760
      %280 = vmatmul.f32.gmra.mxu0 %v279
      %v281 = vpop.f32.mrf.mxu0
      %v282 = vadd.f32 0.0, %v281
      %283 = vdwg.mxu0
      %284 = vmatpush.msra.mxu0 0.0
      %285 = vmatpush.msra.mxu0 0.0
      %286 = vmatpush.msra.mxu0 0.0
      %287 = vmatpush.msra.mxu0 0.0
      %v288 = vand.u32 %v231, 4294901760
      %v289 = vsub.f32 %v231, %v288
      %v290 = vand.u32 %v289, 4294901760
      %v291 = vsub.f32 %v289, %v290
      %v292 = vand.u32 %v291, 4294901760
      %293 = vmatpush.msra.mxu0 %v292
      %v294 = vand.u32 %v230, 4294901760
      %v295 = vsub.f32 %v230, %v294
      %v296 = vand.u32 %v295, 4294901760
      %v297 = vsub.f32 %v295, %v296
      %v298 = vand.u32 %v297, 4294901760
      %299 = vmatpush.msra.mxu0 %v298
      %v300 = vand.u32 %v229, 4294901760
      %v301 = vsub.f32 %v229, %v300
      %v302 = vand.u32 %v301, 4294901760
      %v303 = vsub.f32 %v301, %v302
      %v304 = vand.u32 %v303, 4294901760
      %305 = vmatpush.msra.mxu0 %v304
      %v306 = vand.u32 %v228, 4294901760
      %v307 = vsub.f32 %v228, %v306
      %v308 = vand.u32 %v307, 4294901760
      %v309 = vsub.f32 %v307, %v308
      %v310 = vand.u32 %v309, 4294901760
      %311 = vmatpush.msra.mxu0 %v310
      %v312 = vand.u32 %v227, 4294901760
      %v313 = vsub.f32 %v227, %v312
      %v314 = vand.u32 %v313, 4294901760
      %v315 = vsub.f32 %v313, %v314
      %v316 = vand.u32 %v315, 4294901760
      %317 = vmatpush.msra.mxu0 %v316
      %v318 = vand.u32 %v226, 4294901760
      %v319 = vsub.f32 %v226, %v318
      %v320 = vand.u32 %v319, 4294901760
      %v321 = vsub.f32 %v319, %v320
      %v322 = vand.u32 %v321, 4294901760
      %323 = vmatpush.msra.mxu0 %v322
      %v324 = vand.u32 %v225, 4294901760
      %v325 = vsub.f32 %v225, %v324
      %v326 = vand.u32 %v325, 4294901760
      %v327 = vsub.f32 %v325, %v326
      %v328 = vand.u32 %v327, 4294901760
      %329 = vmatpush.msra.mxu0 %v328
      %v330 = vand.u32 %v224, 4294901760
      %v331 = vsub.f32 %v224, %v330
      %v332 = vand.u32 %v331, 4294901760
      %v333 = vsub.f32 %v331, %v332
      %v334 = vand.u32 %v333, 4294901760
      %335 = vmatpush.msra.mxu0 %v334
      %v336 = vand.u32 %v223, 4294901760
      %v337 = vsub.f32 %v223, %v336
      %v338 = vand.u32 %v337, 4294901760
      %v339 = vsub.f32 %v337, %v338
      %v340 = vand.u32 %v339, 4294901760
      %341 = vmatpush.msra.mxu0 %v340
      %v342 = vand.u32 %v222, 4294901760
      %v343 = vsub.f32 %v222, %v342
      %v344 = vand.u32 %v343, 4294901760
      %v345 = vsub.f32 %v343, %v344
      %v346 = vand.u32 %v345, 4294901760
      %347 = vmatpush.msra.mxu0 %v346
      %v348 = vand.u32 %v221, 4294901760
      %v349 = vsub.f32 %v221, %v348
      %v350 = vand.u32 %v349, 4294901760
      %v351 = vsub.f32 %v349, %v350
      %v352 = vand.u32 %v351, 4294901760
      %353 = vmatpush.msra.mxu0 %v352
      %v354 = vand.u32 %v220, 4294901760
      %v355 = vsub.f32 %v220, %v354
      %v356 = vand.u32 %v355, 4294901760
      %v357 = vsub.f32 %v355, %v356
      %v358 = vand.u32 %v357, 4294901760
      %359 = vmatpush.msra.mxu0 %v358
      %v360 = vand.u32 %v234, 4294901760
      %361 = vmatmul.f32.gmra.mxu0 %v360
      %v362 = vpop.f32.mrf.mxu0
      %v363 = vadd.f32 %v274, %v362
      %v364 = vand.u32 %v237, 4294901760
      %365 = vmatmul.f32.gmra.mxu0 %v364
      %v366 = vpop.f32.mrf.mxu0
      %v367 = vadd.f32 %v282, %v366
      %368 = vdwg.mxu0
      %369 = vmatpush.msra.mxu0 0.0
      %370 = vmatpush.msra.mxu0 0.0
      %371 = vmatpush.msra.mxu0 0.0
      %372 = vmatpush.msra.mxu0 0.0
      %v373 = vand.u32 %v231, 4294901760
      %v374 = vsub.f32 %v231, %v373
      %375 = vmatpush.msra.mxu0 %v374
      %v376 = vand.u32 %v230, 4294901760
      %v377 = vsub.f32 %v230, %v376
      %378 = vmatpush.msra.mxu0 %v377
      %v379 = vand.u32 %v229, 4294901760
      %v380 = vsub.f32 %v229, %v379
      %381 = vmatpush.msra.mxu0 %v380
      %v382 = vand.u32 %v228, 4294901760
      %v383 = vsub.f32 %v228, %v382
      %384 = vmatpush.msra.mxu0 %v383
      %v385 = vand.u32 %v227, 4294901760
      %v386 = vsub.f32 %v227, %v385
      %387 = vmatpush.msra.mxu0 %v386
      %v388 = vand.u32 %v226, 4294901760
      %v389 = vsub.f32 %v226, %v388
      %390 = vmatpush.msra.mxu0 %v389
      %v391 = vand.u32 %v225, 4294901760
      %v392 = vsub.f32 %v225, %v391
      %393 = vmatpush.msra.mxu0 %v392
      %v394 = vand.u32 %v224, 4294901760
      %v395 = vsub.f32 %v224, %v394
      %396 = vmatpush.msra.mxu0 %v395
      %v397 = vand.u32 %v223, 4294901760
      %v398 = vsub.f32 %v223, %v397
      %399 = vmatpush.msra.mxu0 %v398
      %v400 = vand.u32 %v222, 4294901760
      %v401 = vsub.f32 %v222, %v400
      %402 = vmatpush.msra.mxu0 %v401
      %v403 = vand.u32 %v221, 4294901760
      %v404 = vsub.f32 %v221, %v403
      %405 = vmatpush.msra.mxu0 %v404
      %v406 = vand.u32 %v220, 4294901760
      %v407 = vsub.f32 %v220, %v406
      %408 = vmatpush.msra.mxu0 %v407
      %v409 = vand.u32 %v234, 4294901760
      %v410 = vsub.f32 %v234, %v409
      %411 = vmatmul.f32.gmra.mxu0 %v410
      %v412 = vpop.f32.mrf.mxu0
      %v413 = vadd.f32 %v363, %v412
      %v414 = vand.u32 %v237, 4294901760
      %v415 = vsub.f32 %v237, %v414
      %416 = vmatmul.f32.gmra.mxu0 %v415
      %v417 = vpop.f32.mrf.mxu0
      %v418 = vadd.f32 %v367, %v417
      %419 = vdwg.mxu0
      %420 = vmatpush.msra.mxu0 0.0
      %421 = vmatpush.msra.mxu0 0.0
      %422 = vmatpush.msra.mxu0 0.0
      %423 = vmatpush.msra.mxu0 0.0
      %v424 = vand.u32 %v231, 4294901760
      %425 = vmatpush.msra.mxu0 %v424
      %v426 = vand.u32 %v230, 4294901760
      %427 = vmatpush.msra.mxu0 %v426
      %v428 = vand.u32 %v229, 4294901760
      %429 = vmatpush.msra.mxu0 %v428
      %v430 = vand.u32 %v228, 4294901760
      %431 = vmatpush.msra.mxu0 %v430
      %v432 = vand.u32 %v227, 4294901760
      %433 = vmatpush.msra.mxu0 %v432
      %v434 = vand.u32 %v226, 4294901760
      %435 = vmatpush.msra.mxu0 %v434
      %v436 = vand.u32 %v225, 4294901760
      %437 = vmatpush.msra.mxu0 %v436
      %v438 = vand.u32 %v224, 4294901760
      %439 = vmatpush.msra.mxu0 %v438
      %v440 = vand.u32 %v223, 4294901760
      %441 = vmatpush.msra.mxu0 %v440
      %v442 = vand.u32 %v222, 4294901760
      %443 = vmatpush.msra.mxu0 %v442
      %v444 = vand.u32 %v221, 4294901760
      %445 = vmatpush.msra.mxu0 %v444
      %v446 = vand.u32 %v220, 4294901760
      %447 = vmatpush.msra.mxu0 %v446
      %v448 = vand.u32 %v234, 4294901760
      %v449 = vsub.f32 %v234, %v448
      %v450 = vand.u32 %v449, 4294901760
      %451 = vmatmul.f32.gmra.mxu0 %v450
      %v452 = vpop.f32.mrf.mxu0
      %v453 = vadd.f32 %v413, %v452
      %v454 = vand.u32 %v237, 4294901760
      %v455 = vsub.f32 %v237, %v454
      %v456 = vand.u32 %v455, 4294901760
      %457 = vmatmul.f32.gmra.mxu0 %v456
      %v458 = vpop.f32.mrf.mxu0
      %v459 = vadd.f32 %v418, %v458
      %460 = vdwg.mxu0
      %461 = vmatpush.msra.mxu0 0.0
      %462 = vmatpush.msra.mxu0 0.0
      %463 = vmatpush.msra.mxu0 0.0
      %464 = vmatpush.msra.mxu0 0.0
      %v465 = vand.u32 %v231, 4294901760
      %v466 = vsub.f32 %v231, %v465
      %v467 = vand.u32 %v466, 4294901760
      %468 = vmatpush.msra.mxu0 %v467
      %v469 = vand.u32 %v230, 4294901760
      %v470 = vsub.f32 %v230, %v469
      %v471 = vand.u32 %v470, 4294901760
      %472 = vmatpush.msra.mxu0 %v471
      %v473 = vand.u32 %v229, 4294901760
      %v474 = vsub.f32 %v229, %v473
      %v475 = vand.u32 %v474, 4294901760
      %476 = vmatpush.msra.mxu0 %v475
      %v477 = vand.u32 %v228, 4294901760
      %v478 = vsub.f32 %v228, %v477
      %v479 = vand.u32 %v478, 4294901760
      %480 = vmatpush.msra.mxu0 %v479
      %v481 = vand.u32 %v227, 4294901760
      %v482 = vsub.f32 %v227, %v481
      %v483 = vand.u32 %v482, 4294901760
      %484 = vmatpush.msra.mxu0 %v483
      %v485 = vand.u32 %v226, 4294901760
      %v486 = vsub.f32 %v226, %v485
      %v487 = vand.u32 %v486, 4294901760
      %488 = vmatpush.msra.mxu0 %v487
      %v489 = vand.u32 %v225, 4294901760
      %v490 = vsub.f32 %v225, %v489
      %v491 = vand.u32 %v490, 4294901760
      %492 = vmatpush.msra.mxu0 %v491
      %v493 = vand.u32 %v224, 4294901760
      %v494 = vsub.f32 %v224, %v493
      %v495 = vand.u32 %v494, 4294901760
      %496 = vmatpush.msra.mxu0 %v495
      %v497 = vand.u32 %v223, 4294901760
      %v498 = vsub.f32 %v223, %v497
      %v499 = vand.u32 %v498, 4294901760
      %500 = vmatpush.msra.mxu0 %v499
      %v501 = vand.u32 %v222, 4294901760
      %v502 = vsub.f32 %v222, %v501
      %v503 = vand.u32 %v502, 4294901760
      %504 = vmatpush.msra.mxu0 %v503
      %v505 = vand.u32 %v221, 4294901760
      %v506 = vsub.f32 %v221, %v505
      %v507 = vand.u32 %v506, 4294901760
      %508 = vmatpush.msra.mxu0 %v507
      %v509 = vand.u32 %v220, 4294901760
      %v510 = vsub.f32 %v220, %v509
      %v511 = vand.u32 %v510, 4294901760
      %512 = vmatpush.msra.mxu0 %v511
      %v513 = vand.u32 %v234, 4294901760
      %514 = vmatmul.f32.gmra.mxu0 %v513
      %v515 = vpop.f32.mrf.mxu0
      %v516 = vadd.f32 %v453, %v515
      %v517 = vand.u32 %v237, 4294901760
      %518 = vmatmul.f32.gmra.mxu0 %v517
      %v519 = vpop.f32.mrf.mxu0
      %v520 = vadd.f32 %v459, %v519
      %521 = vdwg.mxu0
      %522 = vmatpush.msra.mxu0 0.0
      %523 = vmatpush.msra.mxu0 0.0
      %524 = vmatpush.msra.mxu0 0.0
      %525 = vmatpush.msra.mxu0 0.0
      %v526 = vand.u32 %v231, 4294901760
      %527 = vmatpush.msra.mxu0 %v526
      %v528 = vand.u32 %v230, 4294901760
      %529 = vmatpush.msra.mxu0 %v528
      %v530 = vand.u32 %v229, 4294901760
      %531 = vmatpush.msra.mxu0 %v530
      %v532 = vand.u32 %v228, 4294901760
      %533 = vmatpush.msra.mxu0 %v532
      %v534 = vand.u32 %v227, 4294901760
      %535 = vmatpush.msra.mxu0 %v534
      %v536 = vand.u32 %v226, 4294901760
      %537 = vmatpush.msra.mxu0 %v536
      %v538 = vand.u32 %v225, 4294901760
      %539 = vmatpush.msra.mxu0 %v538
      %v540 = vand.u32 %v224, 4294901760
      %541 = vmatpush.msra.mxu0 %v540
      %v542 = vand.u32 %v223, 4294901760
      %543 = vmatpush.msra.mxu0 %v542
      %v544 = vand.u32 %v222, 4294901760
      %545 = vmatpush.msra.mxu0 %v544
      %v546 = vand.u32 %v221, 4294901760
      %547 = vmatpush.msra.mxu0 %v546
      %v548 = vand.u32 %v220, 4294901760
      %549 = vmatpush.msra.mxu0 %v548
      %v550 = vand.u32 %v234, 4294901760
      %551 = vmatmul.f32.gmra.mxu0 %v550
      %v552 = vpop.f32.mrf.mxu0
      %v553 = vadd.f32 %v516, %v552
      %v554 = vand.u32 %v237, 4294901760
      %555 = vmatmul.f32.gmra.mxu0 %v554
      %v556 = vpop.f32.mrf.mxu0
      %v557 = vadd.f32 %v520, %v556
      %558 = vdwg.mxu0
      %v559 = vld [vmem:[%s2] sm:$0xff]
      %v560 = vld [vmem:[%s2 + $0x8] sm:$0xff]
      %v561 = vld [vmem:[%s2 + $0x10] sm:$0xff]
      %v562 = vld [vmem:[%s2 + $0x18] sm:$0xff]
      %v563 = vld [vmem:[%s212] sm:$0xff]
      %v564 = vld [vmem:[%s212 + $0x8] sm:$0xff]
      %v565 = vld [vmem:[%s212 + $0x10] sm:$0xff]
      %v566 = vld [vmem:[%s212 + $0x18] sm:$0xff]
      %vm567 = vcmask 130048
      %v569 = vsel %vm567, %v559, 0
      %v572 = vsel %vm567, %v560, 0
      %v575 = vsel %vm567, %v561, 0
      %v578 = vsel %vm567, %v562, 0
      %580 = vmatpush.msra.mxu0 0.0
      %581 = vmatpush.msra.mxu0 0.0
      %582 = vmatpush.msra.mxu0 0.0
      %583 = vmatpush.msra.mxu0 0.0
      %584 = vmatpush.msra.mxu0 0.0
      %585 = vmatpush.msra.mxu0 0.0
      %586 = vmatpush.msra.mxu0 0.0
      %587 = vmatpush.msra.mxu0 0.0
      %588 = vmatpush.msra.mxu0 0.0
      %589 = vmatpush.msra.mxu0 0.0
      %590 = vmatpush.msra.mxu0 0.0
      %591 = vmatpush.msra.mxu0 0.0
      %592 = vmatpush.msra.mxu0 0.0
      %593 = vmatpush.msra.mxu0 0.0
      %v594 = vand.u32 %v557, 4294901760
      %595 = vmatpush.msra.mxu0 %v594
      %v596 = vand.u32 %v553, 4294901760
      %597 = vmatpush.msra.mxu0 %v596
      %v598 = vand.u32 %v569, 4294901760
      %v599 = vsub.f32 %v569, %v598
      %v600 = vand.u32 %v599, 4294901760
      %v601 = vsub.f32 %v599, %v600
      %v602 = vand.u32 %v601, 4294901760
      %603 = vmatmul.f32.gmra.mxu0 %v602
      %v604 = vpop.f32.mrf.mxu0
      %v605 = vadd.f32 %v563, %v604
      %v606 = vand.u32 %v572, 4294901760
      %v607 = vsub.f32 %v572, %v606
      %v608 = vand.u32 %v607, 4294901760
      %v609 = vsub.f32 %v607, %v608
      %v610 = vand.u32 %v609, 4294901760
      %611 = vmatmul.f32.gmra.mxu0 %v610
      %v612 = vpop.f32.mrf.mxu0
      %v613 = vadd.f32 %v564, %v612
      %v614 = vand.u32 %v575, 4294901760
      %v615 = vsub.f32 %v575, %v614
      %v616 = vand.u32 %v615, 4294901760
      %v617 = vsub.f32 %v615, %v616
      %v618 = vand.u32 %v617, 4294901760
      %619 = vmatmul.f32.gmra.mxu0 %v618
      %v620 = vpop.f32.mrf.mxu0
      %v621 = vadd.f32 %v565, %v620
      %v622 = vand.u32 %v578, 4294901760
      %v623 = vsub.f32 %v578, %v622
      %v624 = vand.u32 %v623, 4294901760
      %v625 = vsub.f32 %v623, %v624
      %v626 = vand.u32 %v625, 4294901760
      %627 = vmatmul.f32.gmra.mxu0 %v626
      %v628 = vpop.f32.mrf.mxu0
      %v629 = vadd.f32 %v566, %v628
      %630 = vdwg.mxu0
      %631 = vmatpush.msra.mxu0 0.0
      %632 = vmatpush.msra.mxu0 0.0
      %633 = vmatpush.msra.mxu0 0.0
      %634 = vmatpush.msra.mxu0 0.0
      %635 = vmatpush.msra.mxu0 0.0
      %636 = vmatpush.msra.mxu0 0.0
      %637 = vmatpush.msra.mxu0 0.0
      %638 = vmatpush.msra.mxu0 0.0
      %639 = vmatpush.msra.mxu0 0.0
      %640 = vmatpush.msra.mxu0 0.0
      %641 = vmatpush.msra.mxu0 0.0
      %642 = vmatpush.msra.mxu0 0.0
      %643 = vmatpush.msra.mxu0 0.0
      %644 = vmatpush.msra.mxu0 0.0
      %v645 = vand.u32 %v557, 4294901760
      %v646 = vsub.f32 %v557, %v645
      %v647 = vand.u32 %v646, 4294901760
      %v648 = vsub.f32 %v646, %v647
      %v649 = vand.u32 %v648, 4294901760
      %650 = vmatpush.msra.mxu0 %v649
      %v651 = vand.u32 %v553, 4294901760
      %v652 = vsub.f32 %v553, %v651
      %v653 = vand.u32 %v652, 4294901760
      %v654 = vsub.f32 %v652, %v653
      %v655 = vand.u32 %v654, 4294901760
      %656 = vmatpush.msra.mxu0 %v655
      %v657 = vand.u32 %v569, 4294901760
      %658 = vmatmul.f32.gmra.mxu0 %v657
      %v659 = vpop.f32.mrf.mxu0
      %v660 = vadd.f32 %v605, %v659
      %v661 = vand.u32 %v572, 4294901760
      %662 = vmatmul.f32.gmra.mxu0 %v661
      %v663 = vpop.f32.mrf.mxu0
      %v664 = vadd.f32 %v613, %v663
      %v665 = vand.u32 %v575, 4294901760
      %666 = vmatmul.f32.gmra.mxu0 %v665
      %v667 = vpop.f32.mrf.mxu0
      %v668 = vadd.f32 %v621, %v667
      %v669 = vand.u32 %v578, 4294901760
      %670 = vmatmul.f32.gmra.mxu0 %v669
      %v671 = vpop.f32.mrf.mxu0
      %v672 = vadd.f32 %v629, %v671
      %673 = vdwg.mxu0
      %674 = vmatpush.msra.mxu0 0.0
      %675 = vmatpush.msra.mxu0 0.0
      %676 = vmatpush.msra.mxu0 0.0
      %677 = vmatpush.msra.mxu0 0.0
      %678 = vmatpush.msra.mxu0 0.0
      %679 = vmatpush.msra.mxu0 0.0
      %680 = vmatpush.msra.mxu0 0.0
      %681 = vmatpush.msra.mxu0 0.0
      %682 = vmatpush.msra.mxu0 0.0
      %683 = vmatpush.msra.mxu0 0.0
      %684 = vmatpush.msra.mxu0 0.0
      %685 = vmatpush.msra.mxu0 0.0
      %686 = vmatpush.msra.mxu0 0.0
      %687 = vmatpush.msra.mxu0 0.0
      %v688 = vand.u32 %v557, 4294901760
      %v689 = vsub.f32 %v557, %v688
      %690 = vmatpush.msra.mxu0 %v689
      %v691 = vand.u32 %v553, 4294901760
      %v692 = vsub.f32 %v553, %v691
      %693 = vmatpush.msra.mxu0 %v692
      %v694 = vand.u32 %v569, 4294901760
      %v695 = vsub.f32 %v569, %v694
      %696 = vmatmul.f32.gmra.mxu0 %v695
      %v697 = vpop.f32.mrf.mxu0
      %v698 = vadd.f32 %v660, %v697
      %v699 = vand.u32 %v572, 4294901760
      %v700 = vsub.f32 %v572, %v699
      %701 = vmatmul.f32.gmra.mxu0 %v700
      %v702 = vpop.f32.mrf.mxu0
      %v703 = vadd.f32 %v664, %v702
      %v704 = vand.u32 %v575, 4294901760
      %v705 = vsub.f32 %v575, %v704
      %706 = vmatmul.f32.gmra.mxu0 %v705
      %v707 = vpop.f32.mrf.mxu0
      %v708 = vadd.f32 %v668, %v707
      %v709 = vand.u32 %v578, 4294901760
      %v710 = vsub.f32 %v578, %v709
      %711 = vmatmul.f32.gmra.mxu0 %v710
      %v712 = vpop.f32.mrf.mxu0
      %v713 = vadd.f32 %v672, %v712
      %714 = vdwg.mxu0
      %715 = vmatpush.msra.mxu0 0.0
      %716 = vmatpush.msra.mxu0 0.0
      %717 = vmatpush.msra.mxu0 0.0
      %718 = vmatpush.msra.mxu0 0.0
      %719 = vmatpush.msra.mxu0 0.0
      %720 = vmatpush.msra.mxu0 0.0
      %721 = vmatpush.msra.mxu0 0.0
      %722 = vmatpush.msra.mxu0 0.0
      %723 = vmatpush.msra.mxu0 0.0
      %724 = vmatpush.msra.mxu0 0.0
      %725 = vmatpush.msra.mxu0 0.0
      %726 = vmatpush.msra.mxu0 0.0
      %727 = vmatpush.msra.mxu0 0.0
      %728 = vmatpush.msra.mxu0 0.0
      %v729 = vand.u32 %v557, 4294901760
      %730 = vmatpush.msra.mxu0 %v729
      %v731 = vand.u32 %v553, 4294901760
      %732 = vmatpush.msra.mxu0 %v731
      %v733 = vand.u32 %v569, 4294901760
      %v734 = vsub.f32 %v569, %v733
      %v735 = vand.u32 %v734, 4294901760
      %736 = vmatmul.f32.gmra.mxu0 %v735
      %v737 = vpop.f32.mrf.mxu0
      %v738 = vadd.f32 %v698, %v737
      %v739 = vand.u32 %v572, 4294901760
      %v740 = vsub.f32 %v572, %v739
      %v741 = vand.u32 %v740, 4294901760
      %742 = vmatmul.f32.gmra.mxu0 %v741
      %v743 = vpop.f32.mrf.mxu0
      %v744 = vadd.f32 %v703, %v743
      %v745 = vand.u32 %v575, 4294901760
      %v746 = vsub.f32 %v575, %v745
      %v747 = vand.u32 %v746, 4294901760
      %748 = vmatmul.f32.gmra.mxu0 %v747
      %v749 = vpop.f32.mrf.mxu0
      %v750 = vadd.f32 %v708, %v749
      %v751 = vand.u32 %v578, 4294901760
      %v752 = vsub.f32 %v578, %v751
      %v753 = vand.u32 %v752, 4294901760
      %754 = vmatmul.f32.gmra.mxu0 %v753
      %v755 = vpop.f32.mrf.mxu0
      %v756 = vadd.f32 %v713, %v755
      %757 = vdwg.mxu0
      %758 = vmatpush.msra.mxu0 0.0
      %759 = vmatpush.msra.mxu0 0.0
      %760 = vmatpush.msra.mxu0 0.0
      %761 = vmatpush.msra.mxu0 0.0
      %762 = vmatpush.msra.mxu0 0.0
      %763 = vmatpush.msra.mxu0 0.0
      %764 = vmatpush.msra.mxu0 0.0
      %765 = vmatpush.msra.mxu0 0.0
      %766 = vmatpush.msra.mxu0 0.0
      %767 = vmatpush.msra.mxu0 0.0
      %768 = vmatpush.msra.mxu0 0.0
      %769 = vmatpush.msra.mxu0 0.0
      %770 = vmatpush.msra.mxu0 0.0
      %771 = vmatpush.msra.mxu0 0.0
      %v772 = vand.u32 %v557, 4294901760
      %v773 = vsub.f32 %v557, %v772
      %v774 = vand.u32 %v773, 4294901760
      %775 = vmatpush.msra.mxu0 %v774
      %v776 = vand.u32 %v553, 4294901760
      %v777 = vsub.f32 %v553, %v776
      %v778 = vand.u32 %v777, 4294901760
      %779 = vmatpush.msra.mxu0 %v778
      %v780 = vand.u32 %v569, 4294901760
      %781 = vmatmul.f32.gmra.mxu0 %v780
      %v782 = vpop.f32.mrf.mxu0
      %v783 = vadd.f32 %v738, %v782
      %v784 = vand.u32 %v572, 4294901760
      %785 = vmatmul.f32.gmra.mxu0 %v784
      %v786 = vpop.f32.mrf.mxu0
      %v787 = vadd.f32 %v744, %v786
      %v788 = vand.u32 %v575, 4294901760
      %789 = vmatmul.f32.gmra.mxu0 %v788
      %v790 = vpop.f32.mrf.mxu0
      %v791 = vadd.f32 %v750, %v790
      %v792 = vand.u32 %v578, 4294901760
      %793 = vmatmul.f32.gmra.mxu0 %v792
      %v794 = vpop.f32.mrf.mxu0
      %v795 = vadd.f32 %v756, %v794
      %796 = vdwg.mxu0
      %797 = vmatpush.msra.mxu0 0.0
      %798 = vmatpush.msra.mxu0 0.0
      %799 = vmatpush.msra.mxu0 0.0
      %800 = vmatpush.msra.mxu0 0.0
      %801 = vmatpush.msra.mxu0 0.0
      %802 = vmatpush.msra.mxu0 0.0
      %803 = vmatpush.msra.mxu0 0.0
      %804 = vmatpush.msra.mxu0 0.0
      %805 = vmatpush.msra.mxu0 0.0
      %806 = vmatpush.msra.mxu0 0.0
      %807 = vmatpush.msra.mxu0 0.0
      %808 = vmatpush.msra.mxu0 0.0
      %809 = vmatpush.msra.mxu0 0.0
      %810 = vmatpush.msra.mxu0 0.0
      %v811 = vand.u32 %v557, 4294901760
      %812 = vmatpush.msra.mxu0 %v811
      %v813 = vand.u32 %v553, 4294901760
      %814 = vmatpush.msra.mxu0 %v813
      %v815 = vand.u32 %v569, 4294901760
      %816 = vmatmul.f32.gmra.mxu0 %v815
      %v817 = vpop.f32.mrf.mxu0
      %v818 = vadd.f32 %v783, %v817
      %v819 = vand.u32 %v572, 4294901760
      %820 = vmatmul.f32.gmra.mxu0 %v819
      %v821 = vpop.f32.mrf.mxu0
      %v822 = vadd.f32 %v787, %v821
      %v823 = vand.u32 %v575, 4294901760
      %824 = vmatmul.f32.gmra.mxu0 %v823
      %v825 = vpop.f32.mrf.mxu0
      %v826 = vadd.f32 %v791, %v825
      %v827 = vand.u32 %v578, 4294901760
      %828 = vmatmul.f32.gmra.mxu0 %v827
      %v829 = vpop.f32.mrf.mxu0
      %v830 = vadd.f32 %v795, %v829
      %831 = vdwg.mxu0
      %832 = vst [vmem:[%s217] sm:$0xff] %v818
      %833 = vst [vmem:[%s217 + $0x8] sm:$0xff] %v822
      %834 = vst [vmem:[%s217 + $0x10] sm:$0xff] %v826
      %835 = vst [vmem:[%s217 + $0x18] sm:$0xff] %v830
      %p836 = scmp.lt.s32.totalorder %s15, 1
      %s837 = scalar_select %p836, %s15, 1
      %s838 = smul.addr %s837, 4
      %s839 = smul.addr %s838, 8
      %s840 = scalar_lea.vmem %s4, %s839
      // Predicated region
      $region37: #{skip_upsample_forward.1} parent=35 // pred_check
        %p841 = pneg %p127
      $region38: #{skip_upsample_forward.1} parent=35 // pred_check_branch
        %843 = sbr.rel (%p841) target = $region40
      $region39: #{skip_upsample_forward.1} parent=35 // pred_region
        _
      $region40: #{skip_upsample_forward.1} parent=35 // pred_fallthru
        _
    $region36: #{skip_upsample_forward.1} parent=5 // pred_fallthru
      _
    %p844 = scmp.le.s32.totalorder 2, %s10
    // Predicated region
    $region41: #{skip_upsample_forward.1} parent=5 // pred_check
      %p845 = pneg %p844
    $region42: #{skip_upsample_forward.1} parent=5 // pred_check_branch
      %847 = sbr.rel (%p845) target = $region44
    $region43: #{skip_upsample_forward.1} parent=5 // pred_region
      %s848 = ssub.s32 %s10, 2
      // Predicated region
      $region45: #{skip_upsample_forward.1} parent=43 // pred_check
        %p849 = pneg %p133
      $region46: #{skip_upsample_forward.1} parent=43 // pred_check_branch
        %851 = sbr.rel (%p849) target = $region48
      $region47: #{skip_upsample_forward.1} parent=43 // pred_region
        %p852 = scmp.lt.s32.totalorder %s16, 1
        %s853 = scalar_select %p852, %s16, 1
        %s854 = smul.addr %s853, 4
        %s855 = smul.addr %s854, 8
        %s856 = scalar_lea.vmem %s4, %s855
      $region48: #{skip_upsample_forward.1} parent=43 // pred_fallthru
        _
    $region44: #{skip_upsample_forward.1} parent=5 // pred_fallthru
      _
  $region6: #{skip_upsample_forward.1} parent=0 // loop_footer
    %s14 = sadd.s32 1, %s10
  $region7: #{skip_upsample_forward.1} parent=0 // loop_footer_branch
    %9 = sbr.rel target = $region3
  $region8: #{skip_upsample_forward.1} parent=0 // loop_exit
    _

</llo_original>
